<compile_context>
chip_gen: v5e
topology: v5e:2x2
jax: 0.10.0
libtpu: 0.0.40
codegen_flags: <defaults>
</compile_context>

<pallas_src>
import jax
import jax.numpy as jnp
from jax.experimental import pallas as pl
from jax.experimental.pallas import tpu as pltpu


def _round_up(x: int, m: int) -> int:
    return ((x + m - 1) // m) * m


def _logistic_kernel(x_ref, w_ref, b_ref, o_ref):
    # x_ref: (TB, d_in)   w_ref: (d_in, d_out)   b_ref: (1, d_out)   o_ref: (TB, d_out)
    x = x_ref[...].astype(jnp.float32)
    w = w_ref[...].astype(jnp.float32)
    y = jnp.dot(x, w, preferred_element_type=jnp.float32)   # MXU
    y = y + b_ref[...].astype(jnp.float32)                   # VPU epilogue
    o_ref[...] = jnp.maximum(y, 0.0).astype(o_ref.dtype)     # ReLU


def _reference_forward(x: jax.Array, w_t: jax.Array, b: jax.Array) -> jax.Array:
    return jnp.maximum(x @ w_t + b, 0.0)


def base_logistic_forward(
    x: jax.Array,
    w_t: jax.Array,
    b: jax.Array,
    *,
    block_rows: int = 2048,
    min_pallas_batch: int = 64,
) -> jax.Array:
    """relu(x @ w_t + b); flatten(start_dim=1) is a no-op for 2-D x."""
    batch, d_in = x.shape
    d_in_w, d_out = w_t.shape
    assert d_in == d_in_w, (d_in, d_in_w)

    # For toy per-client batches the pallas_call overhead dominates; use fused XLA.
    if batch < min_pallas_batch:
        return _reference_forward(x, w_t, b)

    # Batch tile: multiple of 8 sublanes, no bigger than needed.
    tb = min(_round_up(block_rows, 8), _round_up(batch, 8))
    grid = (pl.cdiv(batch, tb),)   # ragged last block handled by Pallas masking

    w32 = w_t.astype(jnp.float32)
    b32 = b.astype(jnp.float32).reshape(1, d_out)

    itemsize = jnp.dtype(x.dtype).itemsize
    cost = pl.CostEstimate(
        flops=2 * batch * d_in * d_out,
        transcendentals=0,
        bytes_accessed=(batch * d_in * itemsize      # x read
                        + batch * d_out * itemsize   # out write
                        + d_in * d_out * 4           # W
                        + d_out * 4),                # b
    )

    out = pl.pallas_call(
        _logistic_kernel,
        out_shape=jax.ShapeDtypeStruct((batch, d_out), x.dtype),
        grid_spec=pl.GridSpec(
            grid=grid,
            in_specs=[
                pl.BlockSpec((tb, d_in), lambda i: (i, 0)),     # x tile: pipelined
                pl.BlockSpec((d_in, d_out), lambda i: (0, 0)),  # W: VMEM-resident
                pl.BlockSpec((1, d_out), lambda i: (0, 0)),     # b: VMEM-resident
            ],
            out_specs=pl.BlockSpec((tb, d_out), lambda i: (i, 0)),
        ),
        compiler_params=pltpu.CompilerParams(
            dimension_semantics=("parallel",),       # shard batch across TCs (v7x)
            vmem_limit_bytes=32 * 1024 * 1024,       # tiles are small; safe on v5e/v6e/v7x
        ),
        cost_estimate=cost,
    )(x, w32, b32)

    return out  # flatten(start_dim=1) is identity for 2-D x


def init_params(key, input_dim: int = 13, out_dim: int = 10):
    """Deterministic init mirroring nn.Linear default (uniform +-1/sqrt(fan_in))."""
    kw, kb = jax.random.split(key)
    bound = 1.0 / jnp.sqrt(jnp.float32(input_dim))
    # Stored pre-transposed: (input_dim, out_dim) == W.T relative to PyTorch's (out, in).
    w_t = jax.random.uniform(kw, (input_dim, out_dim), jnp.float32, -bound, bound)
    b = jax.random.uniform(kb, (out_dim,), jnp.float32, -bound, bound)
    return w_t, b


if __name__ == "__main__":
    key = jax.random.PRNGKey(0)
    k_x, k_x2, k_x3, k_p = jax.random.split(key, 4)

    input_dim, out_dim = 13, 10
    w_t, b = init_params(k_p, input_dim, out_dim)

    # 1) Pallas path: multi-block grid with a ragged last block
    #    (batch=200, TB=64 -> grid=(4,), last block only 8 valid rows).
    batch = 200
    x = jax.random.normal(k_x, (batch, input_dim), jnp.float32)
    out = jax.block_until_ready(base_logistic_forward(x, w_t, b, block_rows=64))
    ref = _reference_forward(x, w_t, b)
    assert out.shape == (batch, out_dim), out.shape
    assert jnp.allclose(out, ref, atol=1e-5, rtol=1e-5), "Pallas path mismatch (ragged)"

    # 2) Pallas path: exactly divisible batch, single-ish tile.
    batch2 = 256
    x2 = jax.random.normal(k_x3, (batch2, input_dim), jnp.float32)
    out2 = jax.block_until_ready(base_logistic_forward(x2, w_t, b, block_rows=128))
    ref2 = _reference_forward(x2, w_t, b)
    assert out2.shape == (batch2, out_dim)
    assert jnp.allclose(out2, ref2, atol=1e-5, rtol=1e-5), "Pallas path mismatch (even)"

    # 3) Tiny-batch path (FedPer per-client batch): dispatches to fused XLA.
    x_small = jax.random.normal(k_x2, (8, input_dim), jnp.float32)
    out_small = jax.block_until_ready(base_logistic_forward(x_small, w_t, b))
    ref_small = _reference_forward(x_small, w_t, b)
    assert out_small.shape == (8, out_dim)
    assert jnp.allclose(out_small, ref_small, atol=1e-5, rtol=1e-5), "small-batch mismatch"

    print("KERNEL_OK")
</pallas_src>

<mosaic_0001>
module attributes {stable_mosaic.version = 11 : i64} {
  func.func @_logistic_kernel(%arg0: i32, %arg1: memref<64x13xf32, #tpu.memory_space<vmem>>, %arg2: memref<13x10xf32, #tpu.memory_space<vmem>>, %arg3: memref<1x10xf32, #tpu.memory_space<vmem>>, %arg4: memref<64x10xf32, #tpu.memory_space<vmem>>) attributes {dimension_semantics = [#tpu.dimension_semantics<parallel>], iteration_bounds = array<i64: 4>, scalar_prefetch = 0 : i64, scratch_operands = 0 : i64, tpu.core_type = #tpu.core_type<tc>, window_params = [{transform_indices = @transform_0, window_bounds = array<i64: 64, 13>}, {pipeline_mode = #tpu.pipeline_mode<synchronous>, transform_indices = @transform_1, window_bounds = array<i64: 13, 10>}, {pipeline_mode = #tpu.pipeline_mode<synchronous>, transform_indices = @transform_2, window_bounds = array<i64: 1, 10>}, {transform_indices = @transform_3, window_bounds = array<i64: 64, 10>}]} {
    %c0 = arith.constant 0 : index
    %c0_0 = arith.constant 0 : index
    %0 = vector.load %arg1[%c0, %c0_0] : memref<64x13xf32, #tpu.memory_space<vmem>>, vector<64x13xf32>
    %c0_1 = arith.constant 0 : index
    %c0_2 = arith.constant 0 : index
    %1 = vector.load %arg2[%c0_1, %c0_2] : memref<13x10xf32, #tpu.memory_space<vmem>>, vector<13x10xf32>
    %cst = arith.constant dense<0.000000e+00> : vector<64x10xf32>
    %2 = tpu.matmul %0, %1, %cst {dimension_numbers = #tpu.dot_dimension_numbers<[1], [0], [0], [1], [0, 0, 1, 1], [], []>} : vector<64x13xf32>, vector<13x10xf32>, vector<64x10xf32> -> vector<64x10xf32>
    %c0_3 = arith.constant 0 : index
    %c0_4 = arith.constant 0 : index
    %3 = vector.load %arg3[%c0_3, %c0_4] : memref<1x10xf32, #tpu.memory_space<vmem>>, vector<1x10xf32>
    %4 = vector.broadcast %3 : vector<1x10xf32> to vector<64x10xf32>
    %5 = arith.addf %2, %4 : vector<64x10xf32>
    %cst_5 = arith.constant 0.000000e+00 : f32
    %6 = vector.broadcast %cst_5 : f32 to vector<64x10xf32>
    %7 = arith.maximumf %5, %6 : vector<64x10xf32>
    %c0_6 = arith.constant 0 : index
    %c0_7 = arith.constant 0 : index
    %8 = vector.load %arg4[%c0_6, %c0_7] : memref<64x10xf32, #tpu.memory_space<vmem>>, vector<64x10xf32>
    tpu.vector_store %arg4[%c0_6, %c0_7], %7 {strides = array<i32>} : memref<64x10xf32, #tpu.memory_space<vmem>>, vector<64x10xf32>,
    return
  }
  func.func @transform_0(%arg0: i32) -> (i32, i32) {
    %c0_i32 = arith.constant 0 : i32
    %c0_i32_0 = arith.constant 0 : i32
    return %arg0, %c0_i32 : i32, i32
  }
  func.func @transform_1(%arg0: i32) -> (i32, i32) {
    %c0_i32 = arith.constant 0 : i32
    %c0_i32_0 = arith.constant 0 : i32
    %c0_i32_1 = arith.constant 0 : i32
    return %c0_i32, %c0_i32_0 : i32, i32
  }
  func.func @transform_2(%arg0: i32) -> (i32, i32) {
    %c0_i32 = arith.constant 0 : i32
    %c0_i32_0 = arith.constant 0 : i32
    %c0_i32_1 = arith.constant 0 : i32
    return %c0_i32, %c0_i32_0 : i32, i32
  }
  func.func @transform_3(%arg0: i32) -> (i32, i32) {
    %c0_i32 = arith.constant 0 : i32
    %c0_i32_0 = arith.constant 0 : i32
    return %arg0, %c0_i32 : i32, i32
  }
}

</mosaic_0001>

<llo_original>
// kernel: tpu_custom_call.1
$region0: #{tpu_custom_call.1}
  #allocation0 [shape = 'u32[]', space=smem, size = 0x4, offset = 0x4, fixed_abs, tag = 'smem constant byte address 0x4 - core index']
  #allocation1 [shape = 'u32[72,128]{1,0:T(1,128)}', space=vmem, size = 0x9000, scoped, tag = 'internal scratch']
  %s0 = inlined_call_operand.vmem [shape: f32[200,13], index: 0, kind: input, shape index: {}]
  %s1 = inlined_call_operand.vmem [shape: f32[13,10], index: 1, kind: input, shape index: {}]
  %s2 = inlined_call_operand.vmem [shape: f32[1,10], index: 2, kind: input, shape index: {}]
  %s3 = inlined_call_operand.vmem [shape: f32[200,10], index: 3, kind: output, shape index: {}]
  %s4 = sld [smem:[#allocation0]]
  $region93: #{tpu_custom_call.1} parent=0
    _
  %s6 = ssub.s32 1, %s4
  %s7 = scalar_select 0, %s6, %s4
  $region1: #{tpu_custom_call.1} parent=0
    #allocation2 [shape = 'u8[65536]{0}', space=vmem, size = 0x10000, scoped, tag = 'output window, operand 0']
    loop: start=0, step=1, limit=6
    $region2: #{tpu_custom_call.1} parent=1 // loop_pre_header
      _
    $region3: #{tpu_custom_call.1} parent=1 // loop_header
      %s9 = sphi 0, %s13
      %p10 = scmp.ge.s32.totalorder %s9, 6
      %s19 = sphi 0, %s21
      %s22 = sphi 0, %s19
      %s23 = sphi 0, %s22
      %s39 = sphi 0, %s23
      %s43 = sphi 0, %s43
      %s45 = sphi 0, %s43
      %s46 = sphi 0, %s45
      %s60 = sphi 0, %s46
      %s64 = sphi 0, %s64
      %s66 = sphi 0, %s64
      %s67 = sphi 0, %s66
      %s81 = sphi 0, %s67
      %s87 = sphi 0, %s89
      %s90 = sphi 0, %s87
      %s91 = sphi 0, %s90
      %s107 = sphi 0, %s91
    $region4: #{tpu_custom_call.1} parent=1 // loop_header_branch
      %12 = sbr.rel (%p10) target = $region8
    $region5: #{tpu_custom_call.1} parent=1 // loop_body
      %s14 = ssub.s32 %s9, 1
      %s15 = ssub.s32 %s9, 2
      %s16 = sadd.s32 %s9, 1
      %s17 = ssub.s32 %s9, %s16
      %p18 = scmp.eq.s32.totalorder %s17, 0
      %s20 = sadd.s32 %s19, 1
      %s21 = scalar_select %p18, %s19, %s20
      %p24 = pneg %p18
      %p25 = scmp.eq.s32.totalorder %s9, 3
      %p26 = por %p24, %p25
      %p27 = scmp.ne.s32.totalorder %s19, %s22
      %p28 = scmp.eq.s32.totalorder %s9, 0
      %p29 = por %p27, %p28
      %p30 = scmp.ne.s32.totalorder %s19, %s22
      %p31 = scmp.eq.s32.totalorder %s14, 3
      %p32 = por %p30, %p31
      %p33 = scmp.ne.s32.totalorder %s22, %s23
      %p34 = scmp.eq.s32.totalorder %s14, 0
      %p35 = por %p33, %p34
      %p36 = scmp.ne.s32.totalorder %s22, %s23
      %p37 = scmp.eq.s32.totalorder %s15, 3
      %p38 = por %p36, %p37
      %p40 = scmp.ne.s32.totalorder %s23, %s39
      %p41 = scmp.eq.s32.totalorder %s15, 0
      %p42 = por %p40, %p41
      %s44 = sadd.s32 %s43, 1
      %p47 = scmp.eq.s32.totalorder %s9, 3
      %p48 = scmp.ne.s32.totalorder %s43, %s45
      %p49 = scmp.eq.s32.totalorder %s9, 0
      %p50 = por %p48, %p49
      %p51 = scmp.ne.s32.totalorder %s43, %s45
      %p52 = scmp.eq.s32.totalorder %s14, 3
      %p53 = por %p51, %p52
      %p54 = scmp.ne.s32.totalorder %s45, %s46
      %p55 = scmp.eq.s32.totalorder %s14, 0
      %p56 = por %p54, %p55
      %p57 = scmp.ne.s32.totalorder %s45, %s46
      %p58 = scmp.eq.s32.totalorder %s15, 3
      %p59 = por %p57, %p58
      %p61 = scmp.ne.s32.totalorder %s46, %s60
      %p62 = scmp.eq.s32.totalorder %s15, 0
      %p63 = por %p61, %p62
      %s65 = sadd.s32 %s64, 1
      %p68 = scmp.eq.s32.totalorder %s9, 3
      %p69 = scmp.ne.s32.totalorder %s64, %s66
      %p70 = scmp.eq.s32.totalorder %s9, 0
      %p71 = por %p69, %p70
      %p72 = scmp.ne.s32.totalorder %s64, %s66
      %p73 = scmp.eq.s32.totalorder %s14, 3
      %p74 = por %p72, %p73
      %p75 = scmp.ne.s32.totalorder %s66, %s67
      %p76 = scmp.eq.s32.totalorder %s14, 0
      %p77 = por %p75, %p76
      %p78 = scmp.ne.s32.totalorder %s66, %s67
      %p79 = scmp.eq.s32.totalorder %s15, 3
      %p80 = por %p78, %p79
      %p82 = scmp.ne.s32.totalorder %s67, %s81
      %p83 = scmp.eq.s32.totalorder %s15, 0
      %p84 = por %p82, %p83
      %s85 = ssub.s32 %s9, %s16
      %p86 = scmp.eq.s32.totalorder %s85, 0
      %s88 = sadd.s32 %s87, 1
      %s89 = scalar_select %p86, %s87, %s88
      %p92 = pneg %p86
      %p93 = scmp.eq.s32.totalorder %s9, 3
      %p94 = por %p92, %p93
      %p95 = scmp.ne.s32.totalorder %s87, %s90
      %p96 = scmp.eq.s32.totalorder %s9, 0
      %p97 = por %p95, %p96
      %p98 = scmp.ne.s32.totalorder %s87, %s90
      %p99 = scmp.eq.s32.totalorder %s14, 3
      %p100 = por %p98, %p99
      %p101 = scmp.ne.s32.totalorder %s90, %s91
      %p102 = scmp.eq.s32.totalorder %s14, 0
      %p103 = por %p101, %p102
      %p104 = scmp.ne.s32.totalorder %s90, %s91
      %p105 = scmp.eq.s32.totalorder %s15, 3
      %p106 = por %p104, %p105
      %p108 = scmp.ne.s32.totalorder %s91, %s107
      %p109 = scmp.eq.s32.totalorder %s15, 0
      %p110 = por %p108, %p109
      %p111 = scmp.le.s32.totalorder 1, %s9
      %p112 = scmp.lt.s32.totalorder %s9, 5
      %p113 = pnand %p111, %p112
      %p114 = pneg %p113
      // Predicated region
      $region9: #{tpu_custom_call.1} parent=5 // pred_check
        _
      $region10: #{tpu_custom_call.1} parent=5 // pred_check_branch
        %116 = sbr.rel (%p113) target = $region12
      $region11: #{tpu_custom_call.1} parent=5 // pred_region
        %s117 = ssub.s32 %s9, 1
        // Predicated region
        $region13: #{tpu_custom_call.1} parent=11 // pred_check
          %p118 = pneg %p56
        $region14: #{tpu_custom_call.1} parent=11 // pred_check_branch
          %120 = sbr.rel (%p118) target = $region16
        $region15: #{tpu_custom_call.1} parent=11 // pred_region
          _
        $region16: #{tpu_custom_call.1} parent=11 // pred_fallthru
          _
        // Predicated region
        $region17: #{tpu_custom_call.1} parent=11 // pred_check
          %p121 = pneg %p77
        $region18: #{tpu_custom_call.1} parent=11 // pred_check_branch
          %123 = sbr.rel (%p121) target = $region20
        $region19: #{tpu_custom_call.1} parent=11 // pred_region
          _
        $region20: #{tpu_custom_call.1} parent=11 // pred_fallthru
          _
      $region12: #{tpu_custom_call.1} parent=5 // pred_fallthru
        _
      %p124 = scmp.lt.s32.totalorder %s9, 4
      // Predicated region
      $region21: #{tpu_custom_call.1} parent=5 // pred_check
        %p125 = pneg %p124
      $region22: #{tpu_custom_call.1} parent=5 // pred_check_branch
        %127 = sbr.rel (%p125) target = $region24
      $region23: #{tpu_custom_call.1} parent=5 // pred_region
        // Predicated region
        $region25: #{tpu_custom_call.1} parent=23 // pred_check
          %p128 = pneg %p29
        $region26: #{tpu_custom_call.1} parent=23 // pred_check_branch
          %130 = sbr.rel (%p128) target = $region28
        $region27: #{tpu_custom_call.1} parent=23 // pred_region
          %s131 = smul.u32 8, %s9
          %s132 = ssub.s32 25, %s131
          %p133 = scmp.lt.s32.totalorder %s132, 8
          %s134 = scalar_select %p133, %s132, 8
          %s135 = smul.u32 8, %s134
          %p136 = scmp.lt.s32.totalorder %s131, 24
          %s137 = scalar_select %p136, %s131, 24
          %s138 = smul.addr %s137, 8
          %s139 = scalar_lea.vmem %s0, %s138
          %s140 = smul.u32 8, %s9
          %s141 = ssub.s32 25, %s140
          %p142 = scmp.lt.s32.totalorder %s141, 8
          %s143 = scalar_select %p142, %s141, 8
          %s144 = smul.u32 8, %s143
        $region28: #{tpu_custom_call.1} parent=23 // pred_fallthru
          _
      $region24: #{tpu_custom_call.1} parent=5 // pred_fallthru
        _
      %p145 = scmp.le.s32.totalorder 1, %s9
      %p146 = scmp.lt.s32.totalorder %s9, 5
      %p147 = pnand %p145, %p146
      %p148 = pneg %p147
      // Predicated region
      $region29: #{tpu_custom_call.1} parent=5 // pred_check
        _
      $region30: #{tpu_custom_call.1} parent=5 // pred_check_branch
        %150 = sbr.rel (%p147) target = $region32
      $region31: #{tpu_custom_call.1} parent=5 // pred_region
        %s151 = ssub.s32 %s9, 1
        %s152 = smul.u32 8, %s14
        %s153 = ssub.s32 25, %s152
        %p154 = scmp.lt.s32.totalorder %s153, 8
        %s155 = scalar_select %p154, %s153, 8
        %s156 = smul.u32 8, %s155
        %p157 = scmp.lt.s32.totalorder %s152, 24
        %s158 = scalar_select %p157, %s152, 24
        %s159 = smul.addr %s158, 8
        %s160 = scalar_lea.vmem %s0, %s159
        %p161 = pneg %p35
        %p162 = pneg %p32
        %p163 = pneg %p56
        %p164 = pneg %p53
        %p165 = pneg %p77
        %p166 = pneg %p74
        %p167 = pneg %p103
        %p168 = pneg %p100
        %s169 = sand.u32 %s90, 1
        %s170 = sand.u32 %s90, 1
        %s171 = smul.addr %s170, 64
        %s172 = scalar_lea.vmem [#allocation2], %s171
        %s173 = smul.u32 8, %s14
        %s174 = ssub.s32 25, %s173
        %p175 = scmp.lt.s32.totalorder %s174, 8
        %s176 = scalar_select %p175, %s174, 8
        %s177 = smul.u32 8, %s176
        %p178 = scmp.lt.s32.totalorder %s173, 24
        %s179 = scalar_select %p178, %s173, 24
        %s180 = smul.addr %s179, 8
        %s181 = scalar_lea.vmem %s0, %s180
        %s182 = smul.u32 8, %s14
        %s183 = ssub.s32 25, %s182
        %p184 = scmp.lt.s32.totalorder %s183, 8
        %s185 = scalar_select %p184, %s183, 8
        %s186 = smul.u32 8, %s185
        %s187 = smul.u32 8, %s14
        %s188 = ssub.s32 25, %s187
        %p189 = scmp.lt.s32.totalorder %s188, 8
        %s190 = scalar_select %p189, %s188, 8
        %s191 = smul.u32 8, %s190
        %v192 = vld [vmem:[%s181] sm:$0xff]
        %v193 = vld [vmem:[%s181 + $0x8] sm:$0xff]
        %v194 = vld [vmem:[%s181 + $0x10] sm:$0xff]
        %v195 = vld [vmem:[%s181 + $0x18] sm:$0xff]
        %v196 = vld [vmem:[%s181 + $0x20] sm:$0xff]
        %v197 = vld [vmem:[%s181 + $0x28] sm:$0xff]
        %v198 = vld [vmem:[%s181 + $0x30] sm:$0xff]
        %v199 = vld [vmem:[%s181 + $0x38] sm:$0xff]
        %v200 = vld [vmem:[%s1] sm:$0xff]
        %v201 = vld [vmem:[%s1 + $0x8] sm:$0x1f]
        %v202 = vld [vmem:[%s2] sm:$0x1]
        %v204 = vperm.slane %v202, 0
        %vm206 = vcmask 105472
        %v208 = vsel %vm206, %v192, 0
        %v211 = vsel %vm206, %v193, 0
        %v214 = vsel %vm206, %v194, 0
        %v217 = vsel %vm206, %v195, 0
        %v220 = vsel %vm206, %v196, 0
        %v223 = vsel %vm206, %v197, 0
        %v226 = vsel %vm206, %v198, 0
        %v229 = vsel %vm206, %v199, 0
        %vm231 = vcmask 1044480
        %v233 = vsel %vm231, %v201, 0
        %235 = vmatpush.msra.mxu0 0.0
        %236 = vmatpush.msra.mxu0 0.0
        %237 = vmatpush.msra.mxu0 0.0
        %238 = vmatpush.msra.mxu0 0.0
        %239 = vmatpush.msra.mxu0 0.0
        %240 = vmatpush.msra.mxu0 0.0
        %241 = vmatpush.msra.mxu0 0.0
        %242 = vmatpush.msra.mxu0 0.0
        %243 = vmatpush.msra.mxu0 0.0
        %244 = vmatpush.msra.mxu0 0.0
        %245 = vmatpush.msra.mxu0 0.0
        %246 = vmatpush.msra.mxu0 0.0
        %247 = vmatpush.msra.mxu0 0.0
        %248 = vmatpush.msra.mxu0 0.0
        %249 = vmatpush.msra.mxu0 %v233
        %250 = vmatpush.msra.mxu0 %v200
        %251 = vmatmul.f32.gmra.mxu0 %v208
        %v252 = vpop.f32.mrf.mxu0
        %v253 = vadd.f32 %v204, %v252
        %254 = vmatmul.f32.gmra.mxu0 %v211
        %v255 = vpop.f32.mrf.mxu0
        %v256 = vadd.f32 %v204, %v255
        %257 = vmatmul.f32.gmra.mxu0 %v214
        %v258 = vpop.f32.mrf.mxu0
        %v259 = vadd.f32 %v204, %v258
        %260 = vmatmul.f32.gmra.mxu0 %v217
        %v261 = vpop.f32.mrf.mxu0
        %v262 = vadd.f32 %v204, %v261
        %263 = vmatmul.f32.gmra.mxu0 %v220
        %v264 = vpop.f32.mrf.mxu0
        %v265 = vadd.f32 %v204, %v264
        %266 = vmatmul.f32.gmra.mxu0 %v223
        %v267 = vpop.f32.mrf.mxu0
        %v268 = vadd.f32 %v204, %v267
        %269 = vmatmul.f32.gmra.mxu0 %v226
        %v270 = vpop.f32.mrf.mxu0
        %v271 = vadd.f32 %v204, %v270
        %272 = vmatmul.f32.gmra.mxu0 %v229
        %v273 = vpop.f32.mrf.mxu0
        %v274 = vadd.f32 %v204, %v273
        %275 = vdwg.mxu0
        %v276 = vmax.f32 %v253, 0.0
        %v277 = vmax.f32 %v256, 0.0
        %v278 = vmax.f32 %v259, 0.0
        %v279 = vmax.f32 %v262, 0.0
        %v280 = vmax.f32 %v265, 0.0
        %v281 = vmax.f32 %v268, 0.0
        %v282 = vmax.f32 %v271, 0.0
        %v283 = vmax.f32 %v274, 0.0
        %vm284 = vcmask 80896
        %285 = vst.msk [vmem:[%s172] sm:$0xff] %vm284, %v276
        %286 = vst.msk [vmem:[%s172 + $0x8] sm:$0xff] %vm284, %v277
        %287 = vst.msk [vmem:[%s172 + $0x10] sm:$0xff] %vm284, %v278
        %288 = vst.msk [vmem:[%s172 + $0x18] sm:$0xff] %vm284, %v279
        %289 = vst.msk [vmem:[%s172 + $0x20] sm:$0xff] %vm284, %v280
        %290 = vst.msk [vmem:[%s172 + $0x28] sm:$0xff] %vm284, %v281
        %291 = vst.msk [vmem:[%s172 + $0x30] sm:$0xff] %vm284, %v282
        %292 = vst.msk [vmem:[%s172 + $0x38] sm:$0xff] %vm284, %v283
        %s293 = sand.u32 %s90, 1
        %s294 = sand.u32 %s90, 1
        %s295 = smul.addr %s294, 64
        %s296 = scalar_lea.vmem [#allocation2], %s295
        // Predicated region
        $region33: #{tpu_custom_call.1} parent=31 // pred_check
          %p297 = pneg %p100
        $region34: #{tpu_custom_call.1} parent=31 // pred_check_branch
          %299 = sbr.rel (%p297) target = $region36
        $region35: #{tpu_custom_call.1} parent=31 // pred_region
          %s300 = smul.u32 8, %s14
          %s301 = ssub.s32 25, %s300
          %p302 = scmp.lt.s32.totalorder %s301, 8
          %s303 = scalar_select %p302, %s301, 8
          %s304 = smul.u32 8, %s303
          %p305 = scmp.ne.s32.totalorder 0, %s304
          %s306 = smul.addr %s300, 8
          %s307 = scalar_lea.vmem %s3, %s306
          // Predicated region
          $region37: #{tpu_custom_call.1} parent=35 // pred_check
            %p308 = pneg %p305
          $region38: #{tpu_custom_call.1} parent=35 // pred_check_branch
            %310 = sbr.rel (%p308) target = $region40
          $region39: #{tpu_custom_call.1} parent=35 // pred_region
            // Predicated region
            $region41: #{tpu_custom_call.1} parent=39 // pred_check
              _
            $region42: #{tpu_custom_call.1} parent=39 // pred_check_branch
              %312 = sbr.rel (0) target = $region44
            $region43: #{tpu_custom_call.1} parent=39 // pred_region
              // Predicated region
              $region63: #{tpu_custom_call.1} parent=43 // pred_check
                _
              $region64: #{tpu_custom_call.1} parent=43 // pred_check_branch
                %376 = sbr.rel (0) target = $region66
              $region65: #{tpu_custom_call.1} parent=43 // pred_region
                %s377 = sshrl.u32 %s303, 3
                // While loop
                $region67: #{tpu_custom_call.1} parent=65 // loop_pre_header
                  _
                $region68: #{tpu_custom_call.1} parent=65 // loop_header
                  %s379 = sphi 0, %s381
                  %p380 = scmp.ge.s32.totalorder %s379, %s377
                  %s384 = sphi 0, %s405
                  %s385 = sphi %s296, %s408
                  %s386 = sphi %s307, %s409
                $region69: #{tpu_custom_call.1} parent=65 // loop_header_branch
                  %383 = sbr.rel (%p380) target = $region73
                $region70: #{tpu_custom_call.1} parent=65 // loop_body
                  %v387 = vld [vmem:[%s385] sm:$0xff]
                  %388 = vst [vmem:[%s386] sm:$0xff] %v387
                  %v389 = vld [vmem:[%s385 + $0x8] sm:$0xff]
                  %390 = vst [vmem:[%s386 + $0x8] sm:$0xff] %v389
                  %v391 = vld [vmem:[%s385 + $0x10] sm:$0xff]
                  %392 = vst [vmem:[%s386 + $0x10] sm:$0xff] %v391
                  %v393 = vld [vmem:[%s385 + $0x18] sm:$0xff]
                  %394 = vst [vmem:[%s386 + $0x18] sm:$0xff] %v393
                  %v395 = vld [vmem:[%s385 + $0x20] sm:$0xff]
                  %396 = vst [vmem:[%s386 + $0x20] sm:$0xff] %v395
                  %v397 = vld [vmem:[%s385 + $0x28] sm:$0xff]
                  %398 = vst [vmem:[%s386 + $0x28] sm:$0xff] %v397
                  %v399 = vld [vmem:[%s385 + $0x30] sm:$0xff]
                  %400 = vst [vmem:[%s386 + $0x30] sm:$0xff] %v399
                  %v401 = vld [vmem:[%s385 + $0x38] sm:$0xff]
                  %402 = vst [vmem:[%s386 + $0x38] sm:$0xff] %v401
                  %s403 = sadd.s32 1, %s384
                  %p404 = scmp.ge.s32.totalorder %s403, %s377
                  %s405 = scalar_select %p404, 0, %s403
                  %s406 = smul.u32 %s405, 64
                  %s407 = smul.u32 %s405, 64
                  %s408 = scalar_lea.vmem %s296, %s406 [#allocation2]
                  %s409 = scalar_lea.vmem %s307, %s407
                $region71: #{tpu_custom_call.1} parent=65 // loop_footer
                  %s381 = sadd.s32 %s379, 1
                $region72: #{tpu_custom_call.1} parent=65 // loop_footer_branch
                  %378 = sbr.rel target = $region68
                $region73: #{tpu_custom_call.1} parent=65 // loop_exit
                  _
                %s410 = sshrl.u32 %s303, 3
                %s411 = sand.u32 %s303, 7
                %s412 = smul.u32 %s410, 8
                %s413 = smul.u32 8, %s412
                %s414 = scalar_lea.vmem %s296, %s413 [#allocation2]
                %s415 = smul.u32 8, %s412
                %s416 = scalar_lea.vmem %s307, %s415
                // While loop
                $region74: #{tpu_custom_call.1} parent=65 // loop_pre_header
                  _
                $region75: #{tpu_custom_call.1} parent=65 // loop_header
                  %s418 = sphi 0, %s420
                  %p419 = scmp.ge.s32.totalorder %s418, %s411
                  %s423 = sphi 0, %s430
                  %s424 = sphi %s414, %s433
                  %s425 = sphi %s416, %s434
                $region76: #{tpu_custom_call.1} parent=65 // loop_header_branch
                  %422 = sbr.rel (%p419) target = $region80
                $region77: #{tpu_custom_call.1} parent=65 // loop_body
                  %v426 = vld [vmem:[%s424] sm:$0xff]
                  %427 = vst [vmem:[%s425] sm:$0xff] %v426
                  %s428 = sadd.s32 1, %s423
                  %p429 = scmp.ge.s32.totalorder %s428, %s411
                  %s430 = scalar_select %p429, 0, %s428
                  %s431 = smul.u32 %s430, 8
                  %s432 = smul.u32 %s430, 8
                  %s433 = scalar_lea.vmem %s414, %s431 [#allocation2]
                  %s434 = scalar_lea.vmem %s416, %s432
                $region78: #{tpu_custom_call.1} parent=65 // loop_footer
                  %s420 = sadd.s32 %s418, 1
                $region79: #{tpu_custom_call.1} parent=65 // loop_footer_branch
                  %417 = sbr.rel target = $region75
                $region80: #{tpu_custom_call.1} parent=65 // loop_exit
                  _
              $region66: #{tpu_custom_call.1} parent=43 // pred_fallthru
                _
              // Predicated region
              $region81: #{tpu_custom_call.1} parent=43 // pred_check
                _
              $region82: #{tpu_custom_call.1} parent=43 // pred_check_branch
                %436 = sbr.rel target = $region84
              $region83: #{tpu_custom_call.1} parent=43 // pred_region
                _
              $region84: #{tpu_custom_call.1} parent=43 // pred_fallthru
                _
            $region44: #{tpu_custom_call.1} parent=39 // pred_fallthru
              _
            // Predicated region
            $region45: #{tpu_custom_call.1} parent=39 // pred_check
              _
            $region46: #{tpu_custom_call.1} parent=39 // pred_check_branch
              %314 = sbr.rel target = $region48
            $region47: #{tpu_custom_call.1} parent=39 // pred_region
              %s316 = ssub.s32 256, 1
              %s317 = sshrl.u32 %s303, 3
              // While loop
              $region49: #{tpu_custom_call.1} parent=47 // loop_pre_header
                _
              $region50: #{tpu_custom_call.1} parent=47 // loop_header
                %s319 = sphi 0, %s321
                %p320 = scmp.ge.s32.totalorder %s319, %s317
                %s324 = sphi 0, %s345
                %s325 = sphi %s296, %s348
                %s326 = sphi %s307, %s349
              $region51: #{tpu_custom_call.1} parent=47 // loop_header_branch
                %323 = sbr.rel (%p320) target = $region55
              $region52: #{tpu_custom_call.1} parent=47 // loop_body
                %v327 = vld [vmem:[%s325] sm:%s316]
                %328 = vst [vmem:[%s326] sm:%s316] %v327
                %v329 = vld [vmem:[%s325 + $0x8] sm:%s316]
                %330 = vst [vmem:[%s326 + $0x8] sm:%s316] %v329
                %v331 = vld [vmem:[%s325 + $0x10] sm:%s316]
                %332 = vst [vmem:[%s326 + $0x10] sm:%s316] %v331
                %v333 = vld [vmem:[%s325 + $0x18] sm:%s316]
                %334 = vst [vmem:[%s326 + $0x18] sm:%s316] %v333
                %v335 = vld [vmem:[%s325 + $0x20] sm:%s316]
                %336 = vst [vmem:[%s326 + $0x20] sm:%s316] %v335
                %v337 = vld [vmem:[%s325 + $0x28] sm:%s316]
                %338 = vst [vmem:[%s326 + $0x28] sm:%s316] %v337
                %v339 = vld [vmem:[%s325 + $0x30] sm:%s316]
                %340 = vst [vmem:[%s326 + $0x30] sm:%s316] %v339
                %v341 = vld [vmem:[%s325 + $0x38] sm:%s316]
                %342 = vst [vmem:[%s326 + $0x38] sm:%s316] %v341
                %s343 = sadd.s32 1, %s324
                %p344 = scmp.ge.s32.totalorder %s343, %s317
                %s345 = scalar_select %p344, 0, %s343
                %s346 = smul.u32 %s345, 64
                %s347 = smul.u32 %s345, 64
                %s348 = scalar_lea.vmem %s296, %s346 [#allocation2]
                %s349 = scalar_lea.vmem %s307, %s347
              $region53: #{tpu_custom_call.1} parent=47 // loop_footer
                %s321 = sadd.s32 %s319, 1
              $region54: #{tpu_custom_call.1} parent=47 // loop_footer_branch
                %318 = sbr.rel target = $region50
              $region55: #{tpu_custom_call.1} parent=47 // loop_exit
                _
              %s350 = sshrl.u32 %s303, 3
              %s351 = sand.u32 %s303, 7
              %s352 = smul.u32 %s350, 8
              %s353 = smul.u32 8, %s352
              %s354 = scalar_lea.vmem %s296, %s353 [#allocation2]
              %s355 = smul.u32 8, %s352
              %s356 = scalar_lea.vmem %s307, %s355
              // While loop
              $region56: #{tpu_custom_call.1} parent=47 // loop_pre_header
                _
              $region57: #{tpu_custom_call.1} parent=47 // loop_header
                %s358 = sphi 0, %s360
                %p359 = scmp.ge.s32.totalorder %s358, %s351
                %s363 = sphi 0, %s370
                %s364 = sphi %s354, %s373
                %s365 = sphi %s356, %s374
              $region58: #{tpu_custom_call.1} parent=47 // loop_header_branch
                %362 = sbr.rel (%p359) target = $region62
              $region59: #{tpu_custom_call.1} parent=47 // loop_body
                %v366 = vld [vmem:[%s364] sm:%s316]
                %367 = vst [vmem:[%s365] sm:%s316] %v366
                %s368 = sadd.s32 1, %s363
                %p369 = scmp.ge.s32.totalorder %s368, %s351
                %s370 = scalar_select %p369, 0, %s368
                %s371 = smul.u32 %s370, 8
                %s372 = smul.u32 %s370, 8
                %s373 = scalar_lea.vmem %s354, %s371 [#allocation2]
                %s374 = scalar_lea.vmem %s356, %s372
              $region60: #{tpu_custom_call.1} parent=47 // loop_footer
                %s360 = sadd.s32 %s358, 1
              $region61: #{tpu_custom_call.1} parent=47 // loop_footer_branch
                %357 = sbr.rel target = $region57
              $region62: #{tpu_custom_call.1} parent=47 // loop_exit
                _
            $region48: #{tpu_custom_call.1} parent=39 // pred_fallthru
              _
          $region40: #{tpu_custom_call.1} parent=35 // pred_fallthru
            _
          %437 = vnop
        $region36: #{tpu_custom_call.1} parent=31 // pred_fallthru
          _
      $region32: #{tpu_custom_call.1} parent=5 // pred_fallthru
        _
      %p438 = scmp.le.s32.totalorder 2, %s9
      // Predicated region
      $region85: #{tpu_custom_call.1} parent=5 // pred_check
        %p439 = pneg %p438
      $region86: #{tpu_custom_call.1} parent=5 // pred_check_branch
        %441 = sbr.rel (%p439) target = $region88
      $region87: #{tpu_custom_call.1} parent=5 // pred_region
        %s442 = ssub.s32 %s9, 2
        // Predicated region
        $region89: #{tpu_custom_call.1} parent=87 // pred_check
          %p443 = pneg %p106
        $region90: #{tpu_custom_call.1} parent=87 // pred_check_branch
          %445 = sbr.rel (%p443) target = $region92
        $region91: #{tpu_custom_call.1} parent=87 // pred_region
          %s446 = sand.u32 %s91, 1
          %s447 = sand.u32 %s91, 1
          %s448 = smul.addr %s447, 64
          %s449 = scalar_lea.vmem [#allocation2], %s448
        $region92: #{tpu_custom_call.1} parent=87 // pred_fallthru
          _
      $region88: #{tpu_custom_call.1} parent=5 // pred_fallthru
        _
    $region6: #{tpu_custom_call.1} parent=1 // loop_footer
      %s13 = sadd.s32 1, %s9
    $region7: #{tpu_custom_call.1} parent=1 // loop_footer_branch
      %8 = sbr.rel target = $region3
    $region8: #{tpu_custom_call.1} parent=1 // loop_exit
      _

</llo_original>
